<compile_context>
chip_gen: v7x
topology: tpu7x:2x2x1
jax: 0.10.0
libtpu: 0.0.40
codegen_flags: <defaults>
</compile_context>

<pallas_src>
import functools

import jax
import jax.numpy as jnp
import numpy as np
from jax.experimental import pallas as pl
from jax.experimental.pallas import tpu as pltpu


def _round_up(x, m):
    return ((x + m - 1) // m) * m


def _accuracy_many_kernel(topk, B, TB, n_tiles, logits_ref, tgt_ref, out_ref):
    """Accumulate per-k correct counts for one (TB, C) batch tile.

    out_ref is a (1, 8, K) f32 accumulator block (one per parallel split);
    it stays VMEM-resident across the (arbitrary) batch-tile grid axis.
    """
    K = len(topk)

    @pl.when(pl.program_id(1) == 0)
    def _init():
        out_ref[...] = jnp.zeros_like(out_ref)

    logits = logits_ref[...]                       # (TB, C), native dtype
    tgt = tgt_ref[...]                             # (TB, 1) int32

    tb, C = logits.shape
    col = jax.lax.broadcasted_iota(jnp.int32, (tb, C), 1)

    # In-kernel gather of the target-class logit: masked lane-max.
    t_logit = jnp.max(jnp.where(col == tgt, logits, -jnp.inf),
                      axis=-1, keepdims=True)      # (TB, 1)

    # torch.topk tie-breaking: strictly greater logits, or equal logits at a
    # lower class index, push the target down the ranking.
    in_top = (logits > t_logit) | ((logits == t_logit) & (col < tgt))
    rank = jnp.sum(in_top.astype(jnp.int32), axis=-1, keepdims=True)  # (TB, 1)

    # Validity mask from the STATIC batch size and the global row index
    # (handles the ragged last block and any clamped duplicate block).
    blk = pl.program_id(0) * n_tiles + pl.program_id(1)
    row = blk * TB + jax.lax.broadcasted_iota(jnp.int32, (tb, 1), 0)
    valid = row < B

    cols = [((rank < k) & valid).astype(jnp.float32) for k in topk]
    correct = jnp.concatenate(cols, axis=-1)                 # (TB, K)
    partial = jnp.sum(correct, axis=0, keepdims=True)        # (1, K)

    out_ref[...] = out_ref[...] + jnp.broadcast_to(
        partial.reshape(1, 1, K), out_ref.shape)


def accuracy_many(output, target, topk=(1,)):
    """Pallas equivalent of AccuracyMany.forward; returns a list of (1,) arrays."""
    output = jnp.asarray(output)
    target = jnp.asarray(target)

    # Module semantics: if target looks like per-class scores, argmax it.
    if output.shape == target.shape:
        target = jnp.argmax(target, axis=-1)

    if not jnp.issubdtype(output.dtype, jnp.floating):
        output = output.astype(jnp.float32)

    B, C = output.shape
    K = len(topk)
    itemsize = jnp.dtype(output.dtype).itemsize
    row_bytes = C * itemsize

    # --- per-generation tile budget / VMEM limit / TensorCore count ---------
    try:
        kind = jax.devices()[0].device_kind.lower()
    except Exception:  # pragma: no cover
        kind = ""
    if ("v5" in kind) or ("v6" in kind):
        tile_budget = 16 << 20        # 128 MiB VMEM: big streaming tiles
        vmem_limit = 80 << 20
        num_splits = 1                # single TensorCore
    elif "v7" in kind:
        tile_budget = 8 << 20         # 64 MiB VMEM: smaller double-buffered tiles
        vmem_limit = 40 << 20
        num_splits = 2                # 2 TensorCores -> parallel batch split
    else:
        tile_budget = 8 << 20         # unknown: v7x-safe defaults
        vmem_limit = 40 << 20
        num_splits = 1

    # --- batch tiling (no padding of the logits) ----------------------------
    if B <= 8:
        TB = B                                        # block == full batch dim
    else:
        TB = max(8, (tile_budget // max(1, row_bytes)) // 8 * 8)
        TB = min(TB, (B // 8) * 8)                    # keep block start in-bounds
    n_blocks = int(pl.cdiv(B, TB))
    num_splits = max(1, min(num_splits, n_blocks))
    n_tiles = int(pl.cdiv(n_blocks, num_splits))

    tgt2d = target.astype(jnp.int32).reshape(B, 1)

    # Clamp so no block DMA starts past the array; duplicate (clamped) blocks
    # contribute nothing because the in-kernel row mask uses the logical index.
    row_map = lambda c, i: (jnp.minimum(c * n_tiles + i, n_blocks - 1), 0)

    kernel = functools.partial(
        _accuracy_many_kernel,
        tuple(int(k) for k in topk), int(B), int(TB), int(n_tiles))

    cost = pl.CostEstimate(
        flops=6 * B * C,
        transcendentals=0,
        bytes_accessed=B * C * itemsize + B * 4 + num_splits * 8 * K * 4,
    )

    partials = pl.pallas_call(
        kernel,
        out_shape=jax.ShapeDtypeStruct((num_splits, 8, K), jnp.float32),
        grid=(num_splits, n_tiles),
        in_specs=[
            pl.BlockSpec((TB, C), row_map),
            pl.BlockSpec((TB, 1), row_map),
        ],
        out_specs=pl.BlockSpec((1, 8, K), lambda c, i: (c, 0, 0)),
        compiler_params=pltpu.CompilerParams(
            dimension_semantics=("parallel", "arbitrary"),
            vmem_limit_bytes=vmem_limit,
        ),
        cost_estimate=cost,
    )(output, tgt2d)

    # Row 0 of each split's (8, K) accumulator carries the counts (all 8
    # sublanes are identical copies); sum across splits and scale by 1/B.
    totals = partials[:, 0, :].sum(axis=0) * (1.0 / B)        # (K,)

    # PyTorch returns a list of shape-(1,) tensors, one per k.
    return [totals[i:i + 1] for i in range(K)]


def _reference_numpy(output, target, topk):
    output = np.asarray(output)
    target = np.asarray(target)
    if output.shape == target.shape:
        target = target.argmax(-1)
    maxk = max(topk)
    bsz = target.shape[0]
    pred = np.argsort(-output, axis=1, kind="stable")[:, :maxk].T  # (maxk, B)
    correct = pred == target.reshape(1, -1)
    return [np.float32(correct[:k].sum()) / bsz for k in topk]


if __name__ == "__main__":
    key = jax.random.PRNGKey(0)
    k1, k2, k3, k4 = jax.random.split(key, 4)

    # Test 1: class-index targets, ragged batch (exercises the in-kernel mask).
    B, C = 12, 40
    topk = (1, 3, 5)
    logits = jax.random.normal(k1, (B, C), dtype=jnp.float32)
    target = jax.random.randint(k2, (B,), 0, C, dtype=jnp.int32)

    res = accuracy_many(logits, target, topk=topk)
    res = [jax.block_until_ready(r) for r in res]
    expected = _reference_numpy(logits, target, topk)
    for r, e in zip(res, expected):
        assert r.shape == (1,)
        np.testing.assert_allclose(np.asarray(r)[0], e, rtol=1e-6, atol=1e-6)

    # Test 2: per-class score targets (output.shape == target.shape branch).
    B2, C2 = 2, 4
    topk2 = (1, 2)
    logits2 = jax.random.normal(k3, (B2, C2), dtype=jnp.float32)
    scores2 = jax.random.normal(k4, (B2, C2), dtype=jnp.float32)

    res2 = accuracy_many(logits2, scores2, topk=topk2)
    res2 = [jax.block_until_ready(r) for r in res2]
    expected2 = _reference_numpy(logits2, scores2, topk2)
    for r, e in zip(res2, expected2):
        assert r.shape == (1,)
        np.testing.assert_allclose(np.asarray(r)[0], e, rtol=1e-6, atol=1e-6)

    print("KERNEL_OK")
</pallas_src>

<mosaic_0001>
module attributes {stable_mosaic.version = 11 : i64} {
  func.func @_accuracy_many_kernel(%arg0: i32, %arg1: i32, %arg2: memref<8x40xf32, #tpu.memory_space<vmem>>, %arg3: memref<8x1xi32, #tpu.memory_space<vmem>>, %arg4: memref<1x8x3xf32, #tpu.memory_space<vmem>>) attributes {dimension_semantics = [#tpu.dimension_semantics<parallel>, #tpu.dimension_semantics<arbitrary>], iteration_bounds = array<i64: 1, 2>, scalar_prefetch = 0 : i64, scratch_operands = 0 : i64, tpu.core_type = #tpu.core_type<tc>, window_params = [{transform_indices = @transform_0, window_bounds = array<i64: 8, 40>}, {transform_indices = @transform_1, window_bounds = array<i64: 8, 1>}, {transform_indices = @transform_2, window_bounds = array<i64: 1, 8, 3>}]} {
    %c0_i32 = arith.constant 0 : i32
    %0 = arith.cmpi eq, %arg1, %c0_i32 : i32
    %1 = arith.extui %0 : i1 to i32
    %c0_i32_0 = arith.constant 0 : i32
    %2 = arith.cmpi ne, %1, %c0_i32_0 : i32
    scf.if %2 {
      %cst_13 = arith.constant 0.000000e+00 : f32
      %55 = vector.broadcast %cst_13 : f32 to vector<1x8x3xf32>
      %c0_14 = arith.constant 0 : index
      %c0_15 = arith.constant 0 : index
      %c0_16 = arith.constant 0 : index
      %56 = vector.load %arg4[%c0_14, %c0_15, %c0_16] : memref<1x8x3xf32, #tpu.memory_space<vmem>>, vector<1x8x3xf32>
      tpu.vector_store %arg4[%c0_14, %c0_15, %c0_16], %55 {strides = array<i32>} : memref<1x8x3xf32, #tpu.memory_space<vmem>>, vector<1x8x3xf32>,
    } else {
    }
    %c0 = arith.constant 0 : index
    %c0_1 = arith.constant 0 : index
    %3 = vector.load %arg2[%c0, %c0_1] : memref<8x40xf32, #tpu.memory_space<vmem>>, vector<8x40xf32>
    %c0_2 = arith.constant 0 : index
    %c0_3 = arith.constant 0 : index
    %4 = vector.load %arg3[%c0_2, %c0_3] : memref<8x1xi32, #tpu.memory_space<vmem>>, vector<8x1xi32>
    %5 = tpu.iota {dimensions = array<i32: 1>} : vector<8x40xi32>
    %6 = vector.broadcast %4 : vector<8x1xi32> to vector<8x40xi32>
    %7 = arith.cmpi eq, %5, %6 : vector<8x40xi32>
    %cst = arith.constant 0xFF800000 : f32
    %8 = vector.broadcast %cst : f32 to vector<8x40xf32>
    %9 = arith.select %7, %3, %8 : vector<8x40xi1>, vector<8x40xf32>
    %cst_4 = arith.constant dense<0xFF800000> : vector<8xf32>
    %10 = vector.multi_reduction <maximumf>, %9, %cst_4 [1] : vector<8x40xf32> to vector<8xf32>
    %11 = vector.shape_cast %10 : vector<8xf32> to vector<8x1xf32>
    %12 = vector.broadcast %11 : vector<8x1xf32> to vector<8x40xf32>
    %13 = arith.cmpf ogt, %3, %12 : vector<8x40xf32>
    %14 = vector.broadcast %11 : vector<8x1xf32> to vector<8x40xf32>
    %15 = arith.cmpf oeq, %3, %14 : vector<8x40xf32>
    %16 = vector.broadcast %4 : vector<8x1xi32> to vector<8x40xi32>
    %17 = arith.cmpi slt, %5, %16 : vector<8x40xi32>
    %18 = arith.andi %15, %17 : vector<8x40xi1>
    %19 = arith.ori %13, %18 : vector<8x40xi1>
    %20 = arith.extui %19 : vector<8x40xi1> to vector<8x40xi32>
    %cst_5 = arith.constant dense<0> : vector<8xi32>
    %21 = vector.multi_reduction <add>, %20, %cst_5 [1] : vector<8x40xi32> to vector<8xi32>
    %22 = vector.shape_cast %21 : vector<8xi32> to vector<8x1xi32>
    %c2_i32 = arith.constant 2 : i32
    %23 = arith.muli %arg0, %c2_i32 : i32
    %24 = arith.addi %23, %arg1 : i32
    %c8_i32 = arith.constant 8 : i32
    %25 = arith.muli %24, %c8_i32 : i32
    %26 = tpu.iota {dimensions = array<i32: 0>} : vector<8x1xi32>
    %27 = vector.broadcast %25 : i32 to vector<8x1xi32>
    %28 = arith.addi %27, %26 : vector<8x1xi32>
    %c12_i32 = arith.constant 12 : i32
    %29 = vector.broadcast %c12_i32 : i32 to vector<8x1xi32>
    %30 = arith.cmpi slt, %28, %29 : vector<8x1xi32>
    %c1_i32 = arith.constant 1 : i32
    %31 = vector.broadcast %c1_i32 : i32 to vector<8x1xi32>
    %32 = arith.cmpi slt, %22, %31 : vector<8x1xi32>
    %33 = arith.andi %32, %30 : vector<8x1xi1>
    %34 = arith.extui %33 : vector<8x1xi1> to vector<8x1xi32>
    %35 = arith.sitofp %34 : vector<8x1xi32> to vector<8x1xf32>
    %c3_i32 = arith.constant 3 : i32
    %36 = vector.broadcast %c3_i32 : i32 to vector<8x1xi32>
    %37 = arith.cmpi slt, %22, %36 : vector<8x1xi32>
    %38 = arith.andi %37, %30 : vector<8x1xi1>
    %39 = arith.extui %38 : vector<8x1xi1> to vector<8x1xi32>
    %40 = arith.sitofp %39 : vector<8x1xi32> to vector<8x1xf32>
    %c5_i32 = arith.constant 5 : i32
    %41 = vector.broadcast %c5_i32 : i32 to vector<8x1xi32>
    %42 = arith.cmpi slt, %22, %41 : vector<8x1xi32>
    %43 = arith.andi %42, %30 : vector<8x1xi1>
    %44 = arith.extui %43 : vector<8x1xi1> to vector<8x1xi32>
    %45 = arith.sitofp %44 : vector<8x1xi32> to vector<8x1xf32>
    %46 = tpu.concatenate %35, %40, %45 in 1 : vector<8x1xf32>, vector<8x1xf32>, vector<8x1xf32> -> vector<8x3xf32>
    %cst_6 = arith.constant dense<0.000000e+00> : vector<3xf32>
    %47 = vector.multi_reduction <add>, %46, %cst_6 [0] : vector<8x3xf32> to vector<3xf32>
    %48 = vector.shape_cast %47 : vector<3xf32> to vector<1x3xf32>
    %c0_7 = arith.constant 0 : index
    %c0_8 = arith.constant 0 : index
    %c0_9 = arith.constant 0 : index
    %49 = vector.load %arg4[%c0_7, %c0_8, %c0_9] : memref<1x8x3xf32, #tpu.memory_space<vmem>>, vector<1x8x3xf32>
    %50 = vector.shape_cast %48 : vector<1x3xf32> to vector<1x1x3xf32>
    %51 = vector.shape_cast %50 : vector<1x1x3xf32> to vector<1x1x3xf32>
    %52 = vector.broadcast %51 : vector<1x1x3xf32> to vector<1x8x3xf32>
    %53 = arith.addf %49, %52 : vector<1x8x3xf32>
    %c0_10 = arith.constant 0 : index
    %c0_11 = arith.constant 0 : index
    %c0_12 = arith.constant 0 : index
    %54 = vector.load %arg4[%c0_10, %c0_11, %c0_12] : memref<1x8x3xf32, #tpu.memory_space<vmem>>, vector<1x8x3xf32>
    tpu.vector_store %arg4[%c0_10, %c0_11, %c0_12], %53 {strides = array<i32>} : memref<1x8x3xf32, #tpu.memory_space<vmem>>, vector<1x8x3xf32>,
    return
  }
  func.func @transform_0(%arg0: i32, %arg1: i32) -> (i32, i32) {
    %c2_i32 = arith.constant 2 : i32
    %0 = arith.muli %arg0, %c2_i32 : i32
    %1 = arith.addi %0, %arg1 : i32
    %c1_i32 = arith.constant 1 : i32
    %2 = arith.minsi %1, %c1_i32 : i32
    %c0_i32 = arith.constant 0 : i32
    %c0_i32_0 = arith.constant 0 : i32
    return %2, %c0_i32 : i32, i32
  }
  func.func @transform_1(%arg0: i32, %arg1: i32) -> (i32, i32) {
    %c2_i32 = arith.constant 2 : i32
    %0 = arith.muli %arg0, %c2_i32 : i32
    %1 = arith.addi %0, %arg1 : i32
    %c1_i32 = arith.constant 1 : i32
    %2 = arith.minsi %1, %c1_i32 : i32
    %c0_i32 = arith.constant 0 : i32
    %c0_i32_0 = arith.constant 0 : i32
    return %2, %c0_i32 : i32, i32
  }
  func.func @transform_2(%arg0: i32, %arg1: i32) -> (i32, i32, i32) {
    %c0_i32 = arith.constant 0 : i32
    %c0_i32_0 = arith.constant 0 : i32
    %c0_i32_1 = arith.constant 0 : i32
    return %arg0, %c0_i32, %c0_i32_0 : i32, i32, i32
  }
}

</mosaic_0001>

<llo_original>
// kernel: tpu_custom_call.1
$region0: #{tpu_custom_call.1}
  #allocation0 [shape = 'u32[]', space=smem, size = 0x4, offset = 0x4, fixed_abs, tag = 'smem constant byte address 0x4 - core index']
  #allocation1 [shape = 'u32[144,128]{1,0:T(1,128)}', space=vmem, size = 0x12000, scoped, tag = 'internal scratch']
  %s0 = inlined_call_operand.vmem [shape: f32[12,40], index: 0, kind: input, shape index: {}]
  %s1 = inlined_call_operand.vmem [shape: s32[12,1], index: 1, kind: input, shape index: {}]
  %s2 = inlined_call_operand.vmem [shape: f32[1,8,3], index: 2, kind: output, shape index: {}]
  %s3 = sld [smem:[#allocation0]]
  $region45: #{tpu_custom_call.1} parent=0
    _
  %s5 = ssub.s32 1, %s3
  %s6 = scalar_select 0, %s5, %s3
  loop: start=0, step=1, limit=4
  $region2: #{tpu_custom_call.1} parent=0 // loop_pre_header
    _
  $region3: #{tpu_custom_call.1} parent=0 // loop_header
    %s8 = sphi 0, %s12
    %p9 = scmp.ge.s32.totalorder %s8, 4
    %s15 = sphi 0, %s27
    %s16 = sphi 0, %s23
    %s17 = sphi 0, %s15
    %s18 = sphi 0, %s16
    %s19 = sphi 0, %s17
    %s20 = sphi 0, %s18
    %s38 = sphi 0, %s40
    %s41 = sphi 0, %s38
    %s42 = sphi 0, %s41
    %s58 = sphi 0, %s42
    %s72 = sphi 0, %s74
    %s75 = sphi 0, %s72
    %s76 = sphi 0, %s75
    %s92 = sphi 0, %s76
    %s98 = sphi 0, %s100
    %s101 = sphi 0, %s98
    %s102 = sphi 0, %s101
    %s118 = sphi 0, %s102
  $region4: #{tpu_custom_call.1} parent=0 // loop_header_branch
    %11 = sbr.rel (%p9) target = $region8
  $region5: #{tpu_custom_call.1} parent=0 // loop_body
    %s13 = ssub.s32 %s8, 1
    %s14 = ssub.s32 %s8, 2
    %s21 = sadd.s32 1, %s16
    %p22 = scmp.ge.s32.totalorder %s21, 2
    %s23 = scalar_select %p22, 0, %s21
    %s24 = sadd.s32 1, %s15
    %s25 = scalar_select %p22, %s24, %s15
    %p26 = scmp.ge.s32.totalorder %s25, 1
    %s27 = scalar_select %p26, 0, %s25
    %s28 = smul.u32 %s15, 2
    %s29 = sadd.s32 %s28, %s16
    %p30 = scmp.lt.s32.totalorder %s29, 1
    %s31 = scalar_select %p30, %s29, 1
    %s32 = smul.u32 %s27, 2
    %s33 = sadd.s32 %s32, %s23
    %p34 = scmp.lt.s32.totalorder %s33, 1
    %s35 = scalar_select %p34, %s33, 1
    %s36 = ssub.s32 %s31, %s35
    %p37 = scmp.eq.s32.totalorder %s36, 0
    %s39 = sadd.s32 %s38, 1
    %s40 = scalar_select %p37, %s38, %s39
    %p43 = pneg %p37
    %p44 = scmp.eq.s32.totalorder %s8, 1
    %p45 = por %p43, %p44
    %p46 = scmp.ne.s32.totalorder %s38, %s41
    %p47 = scmp.eq.s32.totalorder %s8, 0
    %p48 = por %p46, %p47
    %p49 = scmp.ne.s32.totalorder %s38, %s41
    %p50 = scmp.eq.s32.totalorder %s13, 1
    %p51 = por %p49, %p50
    %p52 = scmp.ne.s32.totalorder %s41, %s42
    %p53 = scmp.eq.s32.totalorder %s13, 0
    %p54 = por %p52, %p53
    %p55 = scmp.ne.s32.totalorder %s41, %s42
    %p56 = scmp.eq.s32.totalorder %s14, 1
    %p57 = por %p55, %p56
    %p59 = scmp.ne.s32.totalorder %s42, %s58
    %p60 = scmp.eq.s32.totalorder %s14, 0
    %p61 = por %p59, %p60
    %s62 = smul.u32 %s15, 2
    %s63 = sadd.s32 %s62, %s16
    %p64 = scmp.lt.s32.totalorder %s63, 1
    %s65 = scalar_select %p64, %s63, 1
    %s66 = smul.u32 %s27, 2
    %s67 = sadd.s32 %s66, %s23
    %p68 = scmp.lt.s32.totalorder %s67, 1
    %s69 = scalar_select %p68, %s67, 1
    %s70 = ssub.s32 %s65, %s69
    %p71 = scmp.eq.s32.totalorder %s70, 0
    %s73 = sadd.s32 %s72, 1
    %s74 = scalar_select %p71, %s72, %s73
    %p77 = pneg %p71
    %p78 = scmp.eq.s32.totalorder %s8, 1
    %p79 = por %p77, %p78
    %p80 = scmp.ne.s32.totalorder %s72, %s75
    %p81 = scmp.eq.s32.totalorder %s8, 0
    %p82 = por %p80, %p81
    %p83 = scmp.ne.s32.totalorder %s72, %s75
    %p84 = scmp.eq.s32.totalorder %s13, 1
    %p85 = por %p83, %p84
    %p86 = scmp.ne.s32.totalorder %s75, %s76
    %p87 = scmp.eq.s32.totalorder %s13, 0
    %p88 = por %p86, %p87
    %p89 = scmp.ne.s32.totalorder %s75, %s76
    %p90 = scmp.eq.s32.totalorder %s14, 1
    %p91 = por %p89, %p90
    %p93 = scmp.ne.s32.totalorder %s76, %s92
    %p94 = scmp.eq.s32.totalorder %s14, 0
    %p95 = por %p93, %p94
    %s96 = ssub.s32 %s15, %s27
    %p97 = scmp.eq.s32.totalorder %s96, 0
    %s99 = sadd.s32 %s98, 1
    %s100 = scalar_select %p97, %s98, %s99
    %p103 = pneg %p97
    %p104 = scmp.eq.s32.totalorder %s8, 1
    %p105 = por %p103, %p104
    %p106 = scmp.ne.s32.totalorder %s98, %s101
    %p107 = scmp.eq.s32.totalorder %s8, 0
    %p108 = por %p106, %p107
    %p109 = scmp.ne.s32.totalorder %s98, %s101
    %p110 = scmp.eq.s32.totalorder %s13, 1
    %p111 = por %p109, %p110
    %p112 = scmp.ne.s32.totalorder %s101, %s102
    %p113 = scmp.eq.s32.totalorder %s13, 0
    %p114 = por %p112, %p113
    %p115 = scmp.ne.s32.totalorder %s101, %s102
    %p116 = scmp.eq.s32.totalorder %s14, 1
    %p117 = por %p115, %p116
    %p119 = scmp.ne.s32.totalorder %s102, %s118
    %p120 = scmp.eq.s32.totalorder %s14, 0
    %p121 = por %p119, %p120
    %p122 = scmp.le.s32.totalorder 1, %s8
    %p123 = scmp.lt.s32.totalorder %s8, 3
    %p124 = pnand %p122, %p123
    %p125 = pneg %p124
    // Predicated region
    $region9: #{tpu_custom_call.1} parent=5 // pred_check
      _
    $region10: #{tpu_custom_call.1} parent=5 // pred_check_branch
      %127 = sbr.rel (%p124) target = $region12
    $region11: #{tpu_custom_call.1} parent=5 // pred_region
      %s128 = ssub.s32 %s8, 1
    $region12: #{tpu_custom_call.1} parent=5 // pred_fallthru
      _
    %p129 = scmp.lt.s32.totalorder %s8, 2
    // Predicated region
    $region13: #{tpu_custom_call.1} parent=5 // pred_check
      %p130 = pneg %p129
    $region14: #{tpu_custom_call.1} parent=5 // pred_check_branch
      %132 = sbr.rel (%p130) target = $region16
    $region15: #{tpu_custom_call.1} parent=5 // pred_region
      // Predicated region
      $region17: #{tpu_custom_call.1} parent=15 // pred_check
        %p133 = pneg %p48
      $region18: #{tpu_custom_call.1} parent=15 // pred_check_branch
        %135 = sbr.rel (%p133) target = $region20
      $region19: #{tpu_custom_call.1} parent=15 // pred_region
        %s136 = smul.u32 %s15, 2
        %s137 = sadd.s32 %s136, %s16
        %p138 = scmp.lt.s32.totalorder %s137, 1
        %s139 = scalar_select %p138, %s137, 1
        %p140 = scmp.lt.s32.totalorder %s139, 1
        %s141 = scalar_select %p140, %s139, 1
        %s142 = smul.addr %s141, 8
        %s143 = scalar_lea.vmem %s0, %s142
        %s144 = smul.u32 %s15, 2
        %s145 = sadd.s32 %s144, %s16
        %p146 = scmp.lt.s32.totalorder %s145, 1
        %s147 = scalar_select %p146, %s145, 1
      $region20: #{tpu_custom_call.1} parent=15 // pred_fallthru
        _
      // Predicated region
      $region21: #{tpu_custom_call.1} parent=15 // pred_check
        %p148 = pneg %p82
      $region22: #{tpu_custom_call.1} parent=15 // pred_check_branch
        %150 = sbr.rel (%p148) target = $region24
      $region23: #{tpu_custom_call.1} parent=15 // pred_region
        %s151 = smul.u32 %s15, 2
        %s152 = sadd.s32 %s151, %s16
        %p153 = scmp.lt.s32.totalorder %s152, 1
        %s154 = scalar_select %p153, %s152, 1
        %p155 = scmp.lt.s32.totalorder %s154, 1
        %s156 = scalar_select %p155, %s154, 1
        %s157 = smul.addr %s156, 8
        %s158 = scalar_lea.vmem %s1, %s157
        %s159 = smul.u32 %s15, 2
        %s160 = sadd.s32 %s159, %s16
        %p161 = scmp.lt.s32.totalorder %s160, 1
        %s162 = scalar_select %p161, %s160, 1
      $region24: #{tpu_custom_call.1} parent=15 // pred_fallthru
        _
    $region16: #{tpu_custom_call.1} parent=5 // pred_fallthru
      _
    %p163 = scmp.le.s32.totalorder 1, %s8
    %p164 = scmp.lt.s32.totalorder %s8, 3
    %p165 = pnand %p163, %p164
    %p166 = pneg %p165
    // Predicated region
    $region25: #{tpu_custom_call.1} parent=5 // pred_check
      _
    $region26: #{tpu_custom_call.1} parent=5 // pred_check_branch
      %168 = sbr.rel (%p165) target = $region28
    $region27: #{tpu_custom_call.1} parent=5 // pred_region
      %s169 = ssub.s32 %s8, 1
      %s170 = smul.u32 %s17, 2
      %s171 = sadd.s32 %s170, %s18
      %p172 = scmp.lt.s32.totalorder %s171, 1
      %s173 = scalar_select %p172, %s171, 1
      %p174 = scmp.lt.s32.totalorder %s173, 1
      %s175 = scalar_select %p174, %s173, 1
      %s176 = smul.addr %s175, 8
      %s177 = scalar_lea.vmem %s0, %s176
      %p178 = pneg %p54
      %p179 = pneg %p51
      %s180 = smul.u32 %s17, 2
      %s181 = sadd.s32 %s180, %s18
      %p182 = scmp.lt.s32.totalorder %s181, 1
      %s183 = scalar_select %p182, %s181, 1
      %p184 = scmp.lt.s32.totalorder %s183, 1
      %s185 = scalar_select %p184, %s183, 1
      %s186 = smul.addr %s185, 8
      %s187 = scalar_lea.vmem %s1, %s186
      %p188 = pneg %p88
      %p189 = pneg %p85
      %p190 = pneg %p114
      %p191 = pneg %p111
      %p192 = scmp.lt.s32.totalorder %s17, 0
      %s193 = scalar_select %p192, %s17, 0
      %s194 = smul.addr %s193, 8
      %s195 = scalar_lea.vmem %s2, %s194
      %s196 = smul.u32 %s17, 2
      %s197 = sadd.s32 %s196, %s18
      %p198 = scmp.lt.s32.totalorder %s197, 1
      %s199 = scalar_select %p198, %s197, 1
      %p200 = scmp.lt.s32.totalorder %s199, 1
      %s201 = scalar_select %p200, %s199, 1
      %s202 = smul.addr %s201, 8
      %s203 = scalar_lea.vmem %s0, %s202
      %s204 = smul.u32 %s17, 2
      %s205 = sadd.s32 %s204, %s18
      %p206 = scmp.lt.s32.totalorder %s205, 1
      %s207 = scalar_select %p206, %s205, 1
      %s208 = smul.u32 %s17, 2
      %s209 = sadd.s32 %s208, %s18
      %p210 = scmp.lt.s32.totalorder %s209, 1
      %s211 = scalar_select %p210, %s209, 1
      %p212 = scmp.lt.s32.totalorder %s211, 1
      %s213 = scalar_select %p212, %s211, 1
      %s214 = smul.addr %s213, 8
      %s215 = scalar_lea.vmem %s1, %s214
      %s216 = smul.u32 %s17, 2
      %s217 = sadd.s32 %s216, %s18
      %p218 = scmp.lt.s32.totalorder %s217, 1
      %s219 = scalar_select %p218, %s217, 1
      %p220 = scmp.lt.s32.totalorder %s17, 0
      %s221 = scalar_select %p220, %s17, 0
      %s222 = smul.addr %s221, 8
      %s223 = scalar_lea.vmem %s2, %s222
      %p224 = scmp.eq.s32.totalorder %s18, 0
      // Predicated region
      $region29: #{tpu_custom_call.1} parent=27 // pred_check
        %p225 = pneg %p224
      $region30: #{tpu_custom_call.1} parent=27 // pred_check_branch
        %227 = sbr.rel (%p225) target = $region32
      $region31: #{tpu_custom_call.1} parent=27 // pred_region
        %vm228 = vcmask 23552
        %229 = vst.msk [vmem:[%s223] sm:$0xff] %vm228, 0.0
      $region32: #{tpu_custom_call.1} parent=27 // pred_fallthru
        _
      %v230 = vld [vmem:[%s203] sm:$0xff]
      %v231 = vld [vmem:[%s215] sm:$0xff]
      %v232 = vlaneseq
      %v233 = vand.u32 %v232, 127
      %234 = vset.pattern.permute.xlu0 0
      %235 = vperm.xlu0 %234, %v231
      %v236 = vpop.permute.xlu0 %235
      %vm237 = vcmp.eq.s32.totalorder %v233, %v236
      %v238 = vsel %vm237, %v230, -inf
      %vm239 = vcmask 326656
      %v240 = vsel %vm239, %v238, -inf
      %241 = vmax.xlane.f32.xlu0 %v240
      %v242 = vpop.xlane.xlu0 %241
      %vm243 = vcmp.gt.f32.partialorder %v230, %v242
      %vm244 = vcmp.eq.f32.partialorder %v230, %v242
      %vm245 = vcmp.lt.s32.totalorder %v233, %v236
      %vm246 = vmand %vm244, %vm245
      %vm247 = vmor %vm243, %vm246
      %v248 = vsel %vm247, 1, 0
      %v249 = vsel %vm239, %v248, 0
      %v250 = vand.u32 %v249, 65535
      %v251 = vshrl.u32 %v249, 16
      %v252 = vcvt.s32.f32 %v250
      %v253 = vcvt.s32.f32 %v251
      %254 = vadd.xlane.f32.xlu0 %v252
      %v255 = vpop.xlane.xlu0 %254
      %256 = vadd.xlane.f32.xlu0 %v253
      %v257 = vpop.xlane.xlu0 %256
      %v258 = vcvt.f32.s32 %v255
      %v259 = vcvt.f32.s32 %v257
      %v260 = vshll.u32 %v259, 16
      %v261 = vadd.s32 %v260, %v258
      %s262 = smul.u32 %s17, 2
      %s263 = sadd.s32 %s262, %s18
      %s264 = smul.u32 %s263, 8
      %v265 = vlaneseq
      %v266 = vshrl.u32 %v265, 7
      %v267 = vstv %s264
      %v268 = vadd.s32 %v267, %v266
      %vm269 = vcmp.lt.s32.totalorder %v268, 12
      %vm270 = vcmp.lt.s32.totalorder %v261, 1
      %vm271 = vmand %vm270, %vm269
      %v272 = vsel %vm271, 1, 0
      %v273 = vcvt.s32.f32 %v272
      %vm274 = vcmp.lt.s32.totalorder %v261, 3
      %vm275 = vmand %vm274, %vm269
      %v276 = vsel %vm275, 1, 0
      %v277 = vcvt.s32.f32 %v276
      %vm278 = vcmp.lt.s32.totalorder %v261, 5
      %vm279 = vmand %vm278, %vm269
      %v280 = vsel %vm279, 1, 0
      %v281 = vcvt.s32.f32 %v280
      %vm282 = vcmask 7168
      %v283 = vsel %vm282, %v273, %v277
      %vm284 = vcmask 15360
      %v285 = vsel %vm284, %v283, %v281
      %vm286 = vcmask 23552
      %v287 = vsel %vm286, %v285, 0.0
      %v288 = vrot.slane %v287, 4
      %v289 = vadd.f32 %v287, %v288
      %v290 = vrot.slane %v289, 2
      %v291 = vadd.f32 %v289, %v290
      %v292 = vrot.slane %v291, 1
      %v293 = vadd.f32 %v291, %v292
      %v294 = vld [vmem:[%s223] sm:$0xff]
      %v295 = vadd.f32 %v294, %v293
      %296 = vst.msk [vmem:[%s223] sm:$0xff] %vm286, %v295
      %p297 = scmp.lt.s32.totalorder %s17, 0
      %s298 = scalar_select %p297, %s17, 0
      %s299 = smul.addr %s298, 8
      %s300 = scalar_lea.vmem %s2, %s299
      // Predicated region
      $region33: #{tpu_custom_call.1} parent=27 // pred_check
        %p301 = pneg %p111
      $region34: #{tpu_custom_call.1} parent=27 // pred_check_branch
        %303 = sbr.rel (%p301) target = $region36
      $region35: #{tpu_custom_call.1} parent=27 // pred_region
        _
      $region36: #{tpu_custom_call.1} parent=27 // pred_fallthru
        _
      // Predicated region
      $region37: #{tpu_custom_call.1} parent=27 // pred_check
        %p304 = pneg %p111
      $region38: #{tpu_custom_call.1} parent=27 // pred_check_branch
        %306 = sbr.rel (%p304) target = $region40
      $region39: #{tpu_custom_call.1} parent=27 // pred_region
        %p307 = scmp.lt.s32.totalorder %s17, 0
        %s308 = scalar_select %p307, %s17, 0
        %s309 = smul.addr %s308, 8
        %s310 = scalar_lea.vmem %s2, %s309
      $region40: #{tpu_custom_call.1} parent=27 // pred_fallthru
        _
    $region28: #{tpu_custom_call.1} parent=5 // pred_fallthru
      _
    %p311 = scmp.le.s32.totalorder 2, %s8
    // Predicated region
    $region41: #{tpu_custom_call.1} parent=5 // pred_check
      %p312 = pneg %p311
    $region42: #{tpu_custom_call.1} parent=5 // pred_check_branch
      %314 = sbr.rel (%p312) target = $region44
    $region43: #{tpu_custom_call.1} parent=5 // pred_region
      %s315 = ssub.s32 %s8, 2
    $region44: #{tpu_custom_call.1} parent=5 // pred_fallthru
      _
  $region6: #{tpu_custom_call.1} parent=0 // loop_footer
    %s12 = sadd.s32 1, %s8
  $region7: #{tpu_custom_call.1} parent=0 // loop_footer_branch
    %7 = sbr.rel target = $region3
  $region8: #{tpu_custom_call.1} parent=0 // loop_exit
    _

</llo_original>
